<compile_context>
chip_gen: v5e
topology: v5e:2x2
jax: 0.10.0
libtpu: 0.0.40
codegen_flags: <defaults>
</compile_context>

<pallas_src>
import functools

import jax
import jax.numpy as jnp
from jax.experimental import pallas as pl
from jax.experimental.pallas import tpu as pltpu

_LANE = 128


def _vmem_budget_bytes():
    """Generation-aware scoped-VMEM budget (~75% of physical VMEM)."""
    cap = 64 * 1024 * 1024  # conservative fallback (v7x per-core physical)
    try:
        cap = int(pltpu.get_tpu_info().vmem_capacity_bytes)
    except Exception:
        pass
    return max(16 * 1024 * 1024, (cap * 3) // 4)


def _fc_softmax(gap_cat, w1_ref, w2_ref):
    """gap_cat: (n, 2C) rows = [gap_sa | gap_ra]. Block-diagonal weights keep the
    two branch MLPs independent, so no cross-term masking is needed.
    Returns (s_sa, s_ra), each (n, C)."""
    z = jnp.dot(gap_cat, w1_ref[...], preferred_element_type=jnp.float32)      # (n, 2H)
    y = jnp.dot(jnp.maximum(z, 0.0), w2_ref[...],
                preferred_element_type=jnp.float32)                            # (n, 2C)
    c = y.shape[-1] // 2
    y_sa, y_ra = y[:, :c], y[:, c:]
    # Numerically stable 2-way softmax; exact reciprocal (runs once per row).
    m = jnp.maximum(y_sa, y_ra)
    e_sa = jnp.exp(y_sa - m)
    e_ra = jnp.exp(y_ra - m)
    inv = 1.0 / (e_sa + e_ra)
    return e_sa * inv, e_ra * inv


def _fused_kernel(sa_ref, ra_ref, w1_ref, w2_ref, sa_out_ref, ra_out_ref, *, inv_hw):
    # Single-pass: GAP + FC + softmax + scale for a (TB, C, HW) slab.
    gap_sa = jnp.sum(sa_ref[...].astype(jnp.float32), axis=-1) * inv_hw       # (TB, C)
    gap_ra = jnp.sum(ra_ref[...].astype(jnp.float32), axis=-1) * inv_hw
    s_sa, s_ra = _fc_softmax(jnp.concatenate([gap_sa, gap_ra], axis=-1),
                             w1_ref, w2_ref)
    # Re-read the slab from VMEM for the scale pass (cheap vlds) rather than
    # keeping the whole loaded value live across the FC/softmax.
    sa_out_ref[...] = (sa_ref[...] * s_sa[:, :, None]).astype(sa_out_ref.dtype)
    ra_out_ref[...] = (ra_ref[...] * s_ra[:, :, None]).astype(ra_out_ref.dtype)


def _scale_kernel(sa_ref, ra_ref, w1_ref, w2_ref, s_sa_ref, s_ra_ref, acc_ref,
                  *, inv_hw, hw, masked):
    # Two-pass path, pass 1: GAP reduction over spatial tiles, FC + softmax at
    # the last tile.  acc_ref: VMEM (1, 2C) running [sum_sa | sum_ra].
    k = pl.program_id(1)

    @pl.when(k == 0)
    def _init():
        acc_ref[...] = jnp.zeros_like(acc_ref)

    sa = sa_ref[...].astype(jnp.float32)
    ra = ra_ref[...].astype(jnp.float32)
    if masked:  # ragged tail tile: zero out lanes beyond the true HW
        t = sa.shape[-1]
        lane = jax.lax.broadcasted_iota(jnp.int32, sa.shape, 2)
        valid = (k * t + lane) < hw
        sa = jnp.where(valid, sa, 0.0)
        ra = jnp.where(valid, ra, 0.0)

    acc_ref[...] += jnp.concatenate(
        [jnp.sum(sa, axis=-1), jnp.sum(ra, axis=-1)], axis=-1)

    @pl.when(k == pl.num_programs(1) - 1)
    def _finish():
        s_sa, s_ra = _fc_softmax(acc_ref[...] * inv_hw, w1_ref, w2_ref)
        s_sa_ref[...] = s_sa[:, :, None]          # (1, C, 1)
        s_ra_ref[...] = s_ra[:, :, None]


def _apply_kernel(sa_ref, ra_ref, s_sa_ref, s_ra_ref, sa_out_ref, ra_out_ref):
    # Two-pass path, pass 2: stream lane-dense tiles, scale, store.
    sa_out_ref[...] = (sa_ref[...] * s_sa_ref[...]).astype(sa_out_ref.dtype)
    ra_out_ref[...] = (ra_ref[...] * s_ra_ref[...]).astype(ra_out_ref.dtype)


def channel_softmax(sa, ra, w1_sa, w2_sa, w1_ra, w2_ra, *,
                    spatial_tile=8192, force_two_pass=False, stream_dtype=None):
    """sa, ra: (B, C, H, W). Weights pre-transposed for x @ W:
    w1_*: (C, H8), w2_*: (H8, C).  stream_dtype: optional dtype (e.g.
    jnp.bfloat16) for the heavy feature-map I/O; GAP/FC/softmax stay f32."""
    b, c, h, w = sa.shape
    assert w1_sa.shape[0] == c and w2_sa.shape[1] == c
    hw = h * w
    inv_hw = 1.0 / float(hw)

    io_dtype = jnp.dtype(stream_dtype) if stream_dtype is not None else sa.dtype
    sa3 = sa.reshape(b, c, hw).astype(io_dtype)
    ra3 = ra.reshape(b, c, hw).astype(io_dtype)

    # Block-diagonal merged FC weights: (2C, 2H8) and (2H8, 2C), f32.
    w1f_sa, w1f_ra = w1_sa.astype(jnp.float32), w1_ra.astype(jnp.float32)
    w2f_sa, w2f_ra = w2_sa.astype(jnp.float32), w2_ra.astype(jnp.float32)
    zc = jnp.zeros_like(w1f_sa)
    zh = jnp.zeros_like(w2f_sa)
    w1_bd = jnp.concatenate(
        [jnp.concatenate([w1f_sa, zc], axis=1),
         jnp.concatenate([zc, w1f_ra], axis=1)], axis=0)                       # (2C, 2H8)
    w2_bd = jnp.concatenate(
        [jnp.concatenate([w2f_sa, zh], axis=1),
         jnp.concatenate([zh, w2f_ra], axis=1)], axis=0)                       # (2H8, 2C)

    vmem_budget = _vmem_budget_bytes()
    item = jnp.dtype(io_dtype).itemsize
    per_batch = c * hw * item   # one feature map row of the slab

    # Per grid step the single-pass path holds 2 inputs + 2 outputs, each
    # double-buffered -> ~8x slab.
    single_pass = (not force_two_pass) and (8 * per_batch <= vmem_budget)

    if single_pass:
        # Batch-tile small feature maps: target ~2 MiB slabs, respect VMEM,
        # keep >= 2 grid steps when possible (v7x megacore / pipeline depth).
        tb = max(1, min((2 * 1024 * 1024) // max(per_batch, 1),
                        vmem_budget // (8 * max(per_batch, 1))))
        if b > 1:
            tb = max(1, min(tb, b // 2))
        tb = min(tb, b)
        while b % tb:
            tb -= 1

        io_spec = pl.BlockSpec((tb, c, hw), lambda i: (i, 0, 0))
        w1_spec = pl.BlockSpec(w1_bd.shape, lambda i: (0, 0))
        w2_spec = pl.BlockSpec(w2_bd.shape, lambda i: (0, 0))

        sa_o, ra_o = pl.pallas_call(
            functools.partial(_fused_kernel, inv_hw=inv_hw),
            grid=(b // tb,),
            in_specs=[io_spec, io_spec, w1_spec, w2_spec],
            out_specs=(io_spec, io_spec),
            out_shape=(jax.ShapeDtypeStruct((b, c, hw), io_dtype),) * 2,
            input_output_aliases={0: 0, 1: 1},
            compiler_params=pltpu.CompilerParams(
                dimension_semantics=("parallel",),
                vmem_limit_bytes=vmem_budget),
        )(sa3, ra3, w1_bd, w2_bd)
    else:
        hw_lane = pl.cdiv(hw, _LANE) * _LANE
        t = max(_LANE, (min(spatial_tile, hw_lane) // _LANE) * _LANE)
        n_t = pl.cdiv(hw, t)
        masked = (hw % t) != 0   # ragged tail tile needs masking in the GAP

        tile_spec = pl.BlockSpec((1, c, t), lambda i, k: (i, 0, k))
        w1_spec = pl.BlockSpec(w1_bd.shape, lambda i, k: (0, 0))
        w2_spec = pl.BlockSpec(w2_bd.shape, lambda i, k: (0, 0))
        scale_spec = pl.BlockSpec((1, c, 1), lambda i, k: (i, 0, 0))

        # Pass 1: GAP reduction over spatial tiles -> per-(b, c) softmax scales.
        s_sa, s_ra = pl.pallas_call(
            functools.partial(_scale_kernel, inv_hw=inv_hw, hw=hw, masked=masked),
            grid=(b, n_t),
            in_specs=[tile_spec, tile_spec, w1_spec, w2_spec],
            out_specs=(scale_spec, scale_spec),
            out_shape=(jax.ShapeDtypeStruct((b, c, 1), jnp.float32),) * 2,
            scratch_shapes=[pltpu.VMEM((1, 2 * c), jnp.float32)],
            compiler_params=pltpu.CompilerParams(
                dimension_semantics=("parallel", "arbitrary"),
                vmem_limit_bytes=vmem_budget),
        )(sa3, ra3, w1_bd, w2_bd)

        # Pass 2: stream the tiles again and apply the scales (lane-dense stores).
        sa_o, ra_o = pl.pallas_call(
            _apply_kernel,
            grid=(b, n_t),
            in_specs=[tile_spec, tile_spec, scale_spec, scale_spec],
            out_specs=(tile_spec, tile_spec),
            out_shape=(jax.ShapeDtypeStruct((b, c, hw), io_dtype),) * 2,
            input_output_aliases={0: 0, 1: 1},
            compiler_params=pltpu.CompilerParams(
                dimension_semantics=("parallel", "parallel"),
                vmem_limit_bytes=vmem_budget),
        )(sa3, ra3, s_sa, s_ra)

    return sa_o.reshape(b, c, h, w), ra_o.reshape(b, c, h, w)


def _reference(sa, ra, w1_sa, w2_sa, w1_ra, w2_ra):
    gap_sa = jnp.mean(sa, axis=(2, 3))
    gap_ra = jnp.mean(ra, axis=(2, 3))
    y_sa = jnp.maximum(gap_sa @ w1_sa, 0.0) @ w2_sa
    y_ra = jnp.maximum(gap_ra @ w1_ra, 0.0) @ w2_ra
    y = jax.nn.softmax(jnp.stack([y_sa, y_ra], axis=0), axis=0)
    return sa * y[0][:, :, None, None], ra * y[1][:, :, None, None]


if __name__ == "__main__":
    B, C, HIDDEN = 2, 64, 8          # C must be 64 to match Linear(64, 8)

    key = jax.random.PRNGKey(0)
    k_sa, k_ra, k1s, k2s, k1r, k2r = jax.random.split(key, 6)

    # Kaiming-normal (fan_in, relu) init, stored pre-transposed for x @ W.
    w1_sa = jax.random.normal(k1s, (C, HIDDEN), jnp.float32) * jnp.sqrt(2.0 / C)
    w2_sa = jax.random.normal(k2s, (HIDDEN, C), jnp.float32) * jnp.sqrt(2.0 / HIDDEN)
    w1_ra = jax.random.normal(k1r, (C, HIDDEN), jnp.float32) * jnp.sqrt(2.0 / C)
    w2_ra = jax.random.normal(k2r, (HIDDEN, C), jnp.float32) * jnp.sqrt(2.0 / HIDDEN)

    # 16x16 (lane-multiple HW) and 14x14 (non-multiple HW -> full-extent block /
    # ragged-tail masking, no pad/slice) cases.
    for (H, W) in [(16, 16), (14, 14)]:
        ksa, kra = jax.random.split(jax.random.fold_in(k_sa, H), 2)
        sa = jax.random.normal(ksa, (B, C, H, W), dtype=jnp.float32)
        ra = jax.random.normal(kra, (B, C, H, W), dtype=jnp.float32)
        sa_exp, ra_exp = _reference(sa, ra, w1_sa, w2_sa, w1_ra, w2_ra)

        # Path 1: fused single-pass kernel (batch-tiled slabs).
        sa_out, ra_out = channel_softmax(sa, ra, w1_sa, w2_sa, w1_ra, w2_ra)
        jax.block_until_ready((sa_out, ra_out))
        assert jnp.allclose(sa_out, sa_exp, atol=1e-3, rtol=1e-3)
        assert jnp.allclose(ra_out, ra_exp, atol=1e-3, rtol=1e-3)

        # Path 2: two-pass spatially-tiled kernels, forced with a small tile so
        # the reduction/accumulator path (incl. ragged tail) is exercised here.
        sa_out2, ra_out2 = channel_softmax(sa, ra, w1_sa, w2_sa, w1_ra, w2_ra,
                                           spatial_tile=128, force_two_pass=True)
        jax.block_until_ready((sa_out2, ra_out2))
        assert jnp.allclose(sa_out2, sa_exp, atol=1e-3, rtol=1e-3)
        assert jnp.allclose(ra_out2, ra_exp, atol=1e-3, rtol=1e-3)

    # Optional bf16 streaming mode (halves HBM bytes; compute stays f32).
    sa = jax.random.normal(k_sa, (B, C, 16, 16), dtype=jnp.float32)
    ra = jax.random.normal(k_ra, (B, C, 16, 16), dtype=jnp.float32)
    sa_exp, ra_exp = _reference(sa, ra, w1_sa, w2_sa, w1_ra, w2_ra)
    sa_bf, ra_bf = channel_softmax(sa, ra, w1_sa, w2_sa, w1_ra, w2_ra,
                                   stream_dtype=jnp.bfloat16)
    jax.block_until_ready((sa_bf, ra_bf))
    assert sa_bf.dtype == jnp.bfloat16 and ra_bf.dtype == jnp.bfloat16
    assert jnp.allclose(sa_bf.astype(jnp.float32), sa_exp, atol=5e-2, rtol=5e-2)
    assert jnp.allclose(ra_bf.astype(jnp.float32), ra_exp, atol=5e-2, rtol=5e-2)

    print("KERNEL_OK")
</pallas_src>

<mosaic_0001>
module attributes {stable_mosaic.version = 11 : i64} {
  func.func @_fused_kernel(%arg0: i32, %arg1: memref<1x64x256xf32, #tpu.memory_space<vmem>>, %arg2: memref<1x64x256xf32, #tpu.memory_space<vmem>>, %arg3: memref<128x16xf32, #tpu.memory_space<vmem>>, %arg4: memref<16x128xf32, #tpu.memory_space<vmem>>, %arg5: memref<1x64x256xf32, #tpu.memory_space<vmem>>, %arg6: memref<1x64x256xf32, #tpu.memory_space<vmem>>) attributes {dimension_semantics = [#tpu.dimension_semantics<parallel>], iteration_bounds = array<i64: 2>, scalar_prefetch = 0 : i64, scratch_operands = 0 : i64, tpu.core_type = #tpu.core_type<tc>, window_params = [{transform_indices = @transform_0, window_bounds = array<i64: 1, 64, 256>}, {transform_indices = @transform_1, window_bounds = array<i64: 1, 64, 256>}, {pipeline_mode = #tpu.pipeline_mode<synchronous>, transform_indices = @transform_2, window_bounds = array<i64: 128, 16>}, {pipeline_mode = #tpu.pipeline_mode<synchronous>, transform_indices = @transform_3, window_bounds = array<i64: 16, 128>}, {transform_indices = @transform_4, window_bounds = array<i64: 1, 64, 256>}, {transform_indices = @transform_5, window_bounds = array<i64: 1, 64, 256>}]} {
    %c0 = arith.constant 0 : index
    %c0_0 = arith.constant 0 : index
    %c0_1 = arith.constant 0 : index
    %0 = vector.load %arg1[%c0, %c0_0, %c0_1] : memref<1x64x256xf32, #tpu.memory_space<vmem>>, vector<1x64x256xf32>
    %cst = arith.constant dense<0.000000e+00> : vector<1x64xf32>
    %1 = vector.multi_reduction <add>, %0, %cst [2] : vector<1x64x256xf32> to vector<1x64xf32>
    %cst_2 = arith.constant 3.906250e-03 : f32
    %2 = vector.broadcast %cst_2 : f32 to vector<1x64xf32>
    %3 = arith.mulf %1, %2 : vector<1x64xf32>
    %c0_3 = arith.constant 0 : index
    %c0_4 = arith.constant 0 : index
    %c0_5 = arith.constant 0 : index
    %4 = vector.load %arg2[%c0_3, %c0_4, %c0_5] : memref<1x64x256xf32, #tpu.memory_space<vmem>>, vector<1x64x256xf32>
    %cst_6 = arith.constant dense<0.000000e+00> : vector<1x64xf32>
    %5 = vector.multi_reduction <add>, %4, %cst_6 [2] : vector<1x64x256xf32> to vector<1x64xf32>
    %cst_7 = arith.constant 3.906250e-03 : f32
    %6 = vector.broadcast %cst_7 : f32 to vector<1x64xf32>
    %7 = arith.mulf %5, %6 : vector<1x64xf32>
    %8 = tpu.concatenate %3, %7 in 1 : vector<1x64xf32>, vector<1x64xf32> -> vector<1x128xf32>
    %c0_8 = arith.constant 0 : index
    %c0_9 = arith.constant 0 : index
    %9 = vector.load %arg3[%c0_8, %c0_9] : memref<128x16xf32, #tpu.memory_space<vmem>>, vector<128x16xf32>
    %cst_10 = arith.constant dense<0.000000e+00> : vector<1x16xf32>
    %10 = tpu.matmul %8, %9, %cst_10 {dimension_numbers = #tpu.dot_dimension_numbers<[1], [0], [0], [1], [0, 0, 1, 1], [], []>} : vector<1x128xf32>, vector<128x16xf32>, vector<1x16xf32> -> vector<1x16xf32>
    %cst_11 = arith.constant 0.000000e+00 : f32
    %11 = vector.broadcast %cst_11 : f32 to vector<1x16xf32>
    %12 = arith.maximumf %10, %11 : vector<1x16xf32>
    %c0_12 = arith.constant 0 : index
    %c0_13 = arith.constant 0 : index
    %13 = vector.load %arg4[%c0_12, %c0_13] : memref<16x128xf32, #tpu.memory_space<vmem>>, vector<16x128xf32>
    %cst_14 = arith.constant dense<0.000000e+00> : vector<1x128xf32>
    %14 = tpu.matmul %12, %13, %cst_14 {dimension_numbers = #tpu.dot_dimension_numbers<[1], [0], [0], [1], [0, 0, 1, 1], [], []>} : vector<1x16xf32>, vector<16x128xf32>, vector<1x128xf32> -> vector<1x128xf32>
    %15 = vector.extract_strided_slice %14 {offsets = [0, 0], sizes = [1, 64], strides = [1, 1]} : vector<1x128xf32> to vector<1x64xf32>
    %16 = vector.extract_strided_slice %14 {offsets = [0, 64], sizes = [1, 64], strides = [1, 1]} : vector<1x128xf32> to vector<1x64xf32>
    %17 = arith.maximumf %15, %16 : vector<1x64xf32>
    %18 = arith.subf %15, %17 : vector<1x64xf32>
    %19 = math.exp %18 : vector<1x64xf32>
    %20 = arith.subf %16, %17 : vector<1x64xf32>
    %21 = math.exp %20 : vector<1x64xf32>
    %22 = arith.addf %19, %21 : vector<1x64xf32>
    %cst_15 = arith.constant 1.000000e+00 : f32
    %23 = vector.broadcast %cst_15 : f32 to vector<1x64xf32>
    %24 = arith.divf %23, %22 : vector<1x64xf32>
    %25 = arith.mulf %19, %24 : vector<1x64xf32>
    %26 = arith.mulf %21, %24 : vector<1x64xf32>
    %c0_16 = arith.constant 0 : index
    %c0_17 = arith.constant 0 : index
    %c0_18 = arith.constant 0 : index
    %27 = vector.load %arg1[%c0_16, %c0_17, %c0_18] : memref<1x64x256xf32, #tpu.memory_space<vmem>>, vector<1x64x256xf32>
    %28 = vector.shape_cast %25 : vector<1x64xf32> to vector<1x64x1xf32>
    %29 = vector.broadcast %28 : vector<1x64x1xf32> to vector<1x64x256xf32>
    %30 = arith.mulf %27, %29 : vector<1x64x256xf32>
    %c0_19 = arith.constant 0 : index
    %c0_20 = arith.constant 0 : index
    %c0_21 = arith.constant 0 : index
    %31 = vector.load %arg5[%c0_19, %c0_20, %c0_21] : memref<1x64x256xf32, #tpu.memory_space<vmem>>, vector<1x64x256xf32>
    tpu.vector_store %arg5[%c0_19, %c0_20, %c0_21], %30 {strides = array<i32>} : memref<1x64x256xf32, #tpu.memory_space<vmem>>, vector<1x64x256xf32>,
    %c0_22 = arith.constant 0 : index
    %c0_23 = arith.constant 0 : index
    %c0_24 = arith.constant 0 : index
    %32 = vector.load %arg2[%c0_22, %c0_23, %c0_24] : memref<1x64x256xf32, #tpu.memory_space<vmem>>, vector<1x64x256xf32>
    %33 = vector.shape_cast %26 : vector<1x64xf32> to vector<1x64x1xf32>
    %34 = vector.broadcast %33 : vector<1x64x1xf32> to vector<1x64x256xf32>
    %35 = arith.mulf %32, %34 : vector<1x64x256xf32>
    %c0_25 = arith.constant 0 : index
    %c0_26 = arith.constant 0 : index
    %c0_27 = arith.constant 0 : index
    %36 = vector.load %arg6[%c0_25, %c0_26, %c0_27] : memref<1x64x256xf32, #tpu.memory_space<vmem>>, vector<1x64x256xf32>
    tpu.vector_store %arg6[%c0_25, %c0_26, %c0_27], %35 {strides = array<i32>} : memref<1x64x256xf32, #tpu.memory_space<vmem>>, vector<1x64x256xf32>,
    return
  }
  func.func @transform_0(%arg0: i32) -> (i32, i32, i32) {
    %c0_i32 = arith.constant 0 : i32
    %c0_i32_0 = arith.constant 0 : i32
    %c0_i32_1 = arith.constant 0 : i32
    return %arg0, %c0_i32, %c0_i32_0 : i32, i32, i32
  }
  func.func @transform_1(%arg0: i32) -> (i32, i32, i32) {
    %c0_i32 = arith.constant 0 : i32
    %c0_i32_0 = arith.constant 0 : i32
    %c0_i32_1 = arith.constant 0 : i32
    return %arg0, %c0_i32, %c0_i32_0 : i32, i32, i32
  }
  func.func @transform_2(%arg0: i32) -> (i32, i32) {
    %c0_i32 = arith.constant 0 : i32
    %c0_i32_0 = arith.constant 0 : i32
    %c0_i32_1 = arith.constant 0 : i32
    return %c0_i32, %c0_i32_0 : i32, i32
  }
  func.func @transform_3(%arg0: i32) -> (i32, i32) {
    %c0_i32 = arith.constant 0 : i32
    %c0_i32_0 = arith.constant 0 : i32
    %c0_i32_1 = arith.constant 0 : i32
    return %c0_i32, %c0_i32_0 : i32, i32
  }
  func.func @transform_4(%arg0: i32) -> (i32, i32, i32) {
    %c0_i32 = arith.constant 0 : i32
    %c0_i32_0 = arith.constant 0 : i32
    %c0_i32_1 = arith.constant 0 : i32
    return %arg0, %c0_i32, %c0_i32_0 : i32, i32, i32
  }
  func.func @transform_5(%arg0: i32) -> (i32, i32, i32) {
    %c0_i32 = arith.constant 0 : i32
    %c0_i32_0 = arith.constant 0 : i32
    %c0_i32_1 = arith.constant 0 : i32
    return %arg0, %c0_i32, %c0_i32_0 : i32, i32, i32
  }
}

</mosaic_0001>

<llo_original>
// kernel: tpu_custom_call.1
$region0: #{tpu_custom_call.1}
  #allocation0 [shape = 'u32[]', space=smem, size = 0x4, offset = 0x4, fixed_abs, tag = 'smem constant byte address 0x4 - core index']
  #allocation1 [shape = 'u32[72,128]{1,0:T(1,128)}', space=vmem, size = 0x9000, scoped, tag = 'internal scratch']
  %s0 = inlined_call_operand.hbm [shape: f32[2,64,256], index: 0, kind: input, shape index: {}, may-alias: {0,4}]
  %s1 = inlined_call_operand.hbm [shape: f32[2,64,256], index: 1, kind: input, shape index: {}, may-alias: {1,5}]
  %s2 = inlined_call_operand.vmem [shape: f32[128,16], index: 2, kind: input, shape index: {}]
  %s3 = inlined_call_operand.vmem [shape: f32[16,128], index: 3, kind: input, shape index: {}]
  %s4 = inlined_call_operand.hbm [shape: f32[2,64,256], index: 4, kind: output, shape index: {0}, may-alias: {0,4}]
  %s5 = inlined_call_operand.hbm [shape: f32[2,64,256], index: 5, kind: output, shape index: {1}, may-alias: {1,5}]
  %6 = xla_tuple %s4, %s5
  %s7 = sld [smem:[#allocation0]]
  $region65: #{tpu_custom_call.1} parent=0
    _
  %s9 = ssub.s32 1, %s7
  %s10 = scalar_select 0, %s9, %s7
  $region1: #{tpu_custom_call.1} parent=0
    #allocation2 [shape = 'u8[131072]{0}', space=vmem, size = 0x20000, scoped, tag = 'input window, operand 0']
    #allocation3 [shape = 's32[2]{0}', space=sflag, size = 0x8, scoped, tag = 'scoped memory for tpu_custom_call.1']
    #allocation4 [shape = 's32[2]{0}', space=sflag, size = 0x8, scoped, tag = 'scoped memory for tpu_custom_call.1']
    #allocation5 [shape = 'u8[131072]{0}', space=vmem, size = 0x20000, scoped, tag = 'input window, operand 1']
    #allocation6 [shape = 's32[2]{0}', space=sflag, size = 0x8, scoped, tag = 'scoped memory for tpu_custom_call.1']
    #allocation7 [shape = 'u8[131072]{0}', space=vmem, size = 0x20000, scoped, tag = 'output window, operand 0']
    #allocation8 [shape = 'u8[131072]{0}', space=vmem, size = 0x20000, scoped, tag = 'output window, operand 1']
    #allocation9 [shape = 's32[2]{0}', space=sflag, size = 0x8, scoped, tag = 'scoped memory for tpu_custom_call.1']
    %11 = vsyncpa [#allocation3], 0
    %s12 = scalar_lea.sflag [#allocation3], 1
    %13 = vsyncpa %s12, 0
    %14 = vsyncpa [#allocation6], 0
    %s15 = scalar_lea.sflag [#allocation6], 1
    %16 = vsyncpa %s15, 0
    %17 = vsyncpa [#allocation4], 0
    %s18 = scalar_lea.sflag [#allocation4], 1
    %19 = vsyncpa %s18, 0
    %20 = vsyncpa [#allocation9], 0
    %s21 = scalar_lea.sflag [#allocation9], 1
    %22 = vsyncpa %s21, 0
    loop: start=0, step=1, limit=4
    $region2: #{tpu_custom_call.1} parent=1 // loop_pre_header
      _
    $region3: #{tpu_custom_call.1} parent=1 // loop_header
      %s24 = sphi 0, %s28
      %p25 = scmp.ge.s32.totalorder %s24, 4
      %s34 = sphi 0, %s36
      %s37 = sphi 0, %s34
      %s38 = sphi 0, %s37
      %s54 = sphi 0, %s38
      %s60 = sphi 0, %s62
      %s63 = sphi 0, %s60
      %s64 = sphi 0, %s63
      %s80 = sphi 0, %s64
      %s84 = sphi 0, %s84
      %s86 = sphi 0, %s84
      %s87 = sphi 0, %s86
      %s101 = sphi 0, %s87
      %s105 = sphi 0, %s105
      %s107 = sphi 0, %s105
      %s108 = sphi 0, %s107
      %s122 = sphi 0, %s108
      %s128 = sphi 0, %s130
      %s131 = sphi 0, %s128
      %s132 = sphi 0, %s131
      %s148 = sphi 0, %s132
      %s154 = sphi 0, %s156
      %s157 = sphi 0, %s154
      %s158 = sphi 0, %s157
      %s174 = sphi 0, %s158
    $region4: #{tpu_custom_call.1} parent=1 // loop_header_branch
      %27 = sbr.rel (%p25) target = $region8
    $region5: #{tpu_custom_call.1} parent=1 // loop_body
      %s29 = ssub.s32 %s24, 1
      %s30 = ssub.s32 %s24, 2
      %s31 = sadd.s32 %s24, 1
      %s32 = ssub.s32 %s24, %s31
      %p33 = scmp.eq.s32.totalorder %s32, 0
      %s35 = sadd.s32 %s34, 1
      %s36 = scalar_select %p33, %s34, %s35
      %p39 = pneg %p33
      %p40 = scmp.eq.s32.totalorder %s24, 1
      %p41 = por %p39, %p40
      %p42 = scmp.ne.s32.totalorder %s34, %s37
      %p43 = scmp.eq.s32.totalorder %s24, 0
      %p44 = por %p42, %p43
      %p45 = scmp.ne.s32.totalorder %s34, %s37
      %p46 = scmp.eq.s32.totalorder %s29, 1
      %p47 = por %p45, %p46
      %p48 = scmp.ne.s32.totalorder %s37, %s38
      %p49 = scmp.eq.s32.totalorder %s29, 0
      %p50 = por %p48, %p49
      %p51 = scmp.ne.s32.totalorder %s37, %s38
      %p52 = scmp.eq.s32.totalorder %s30, 1
      %p53 = por %p51, %p52
      %p55 = scmp.ne.s32.totalorder %s38, %s54
      %p56 = scmp.eq.s32.totalorder %s30, 0
      %p57 = por %p55, %p56
      %s58 = ssub.s32 %s24, %s31
      %p59 = scmp.eq.s32.totalorder %s58, 0
      %s61 = sadd.s32 %s60, 1
      %s62 = scalar_select %p59, %s60, %s61
      %p65 = pneg %p59
      %p66 = scmp.eq.s32.totalorder %s24, 1
      %p67 = por %p65, %p66
      %p68 = scmp.ne.s32.totalorder %s60, %s63
      %p69 = scmp.eq.s32.totalorder %s24, 0
      %p70 = por %p68, %p69
      %p71 = scmp.ne.s32.totalorder %s60, %s63
      %p72 = scmp.eq.s32.totalorder %s29, 1
      %p73 = por %p71, %p72
      %p74 = scmp.ne.s32.totalorder %s63, %s64
      %p75 = scmp.eq.s32.totalorder %s29, 0
      %p76 = por %p74, %p75
      %p77 = scmp.ne.s32.totalorder %s63, %s64
      %p78 = scmp.eq.s32.totalorder %s30, 1
      %p79 = por %p77, %p78
      %p81 = scmp.ne.s32.totalorder %s64, %s80
      %p82 = scmp.eq.s32.totalorder %s30, 0
      %p83 = por %p81, %p82
      %s85 = sadd.s32 %s84, 1
      %p88 = scmp.eq.s32.totalorder %s24, 1
      %p89 = scmp.ne.s32.totalorder %s84, %s86
      %p90 = scmp.eq.s32.totalorder %s24, 0
      %p91 = por %p89, %p90
      %p92 = scmp.ne.s32.totalorder %s84, %s86
      %p93 = scmp.eq.s32.totalorder %s29, 1
      %p94 = por %p92, %p93
      %p95 = scmp.ne.s32.totalorder %s86, %s87
      %p96 = scmp.eq.s32.totalorder %s29, 0
      %p97 = por %p95, %p96
      %p98 = scmp.ne.s32.totalorder %s86, %s87
      %p99 = scmp.eq.s32.totalorder %s30, 1
      %p100 = por %p98, %p99
      %p102 = scmp.ne.s32.totalorder %s87, %s101
      %p103 = scmp.eq.s32.totalorder %s30, 0
      %p104 = por %p102, %p103
      %s106 = sadd.s32 %s105, 1
      %p109 = scmp.eq.s32.totalorder %s24, 1
      %p110 = scmp.ne.s32.totalorder %s105, %s107
      %p111 = scmp.eq.s32.totalorder %s24, 0
      %p112 = por %p110, %p111
      %p113 = scmp.ne.s32.totalorder %s105, %s107
      %p114 = scmp.eq.s32.totalorder %s29, 1
      %p115 = por %p113, %p114
      %p116 = scmp.ne.s32.totalorder %s107, %s108
      %p117 = scmp.eq.s32.totalorder %s29, 0
      %p118 = por %p116, %p117
      %p119 = scmp.ne.s32.totalorder %s107, %s108
      %p120 = scmp.eq.s32.totalorder %s30, 1
      %p121 = por %p119, %p120
      %p123 = scmp.ne.s32.totalorder %s108, %s122
      %p124 = scmp.eq.s32.totalorder %s30, 0
      %p125 = por %p123, %p124
      %s126 = ssub.s32 %s24, %s31
      %p127 = scmp.eq.s32.totalorder %s126, 0
      %s129 = sadd.s32 %s128, 1
      %s130 = scalar_select %p127, %s128, %s129
      %p133 = pneg %p127
      %p134 = scmp.eq.s32.totalorder %s24, 1
      %p135 = por %p133, %p134
      %p136 = scmp.ne.s32.totalorder %s128, %s131
      %p137 = scmp.eq.s32.totalorder %s24, 0
      %p138 = por %p136, %p137
      %p139 = scmp.ne.s32.totalorder %s128, %s131
      %p140 = scmp.eq.s32.totalorder %s29, 1
      %p141 = por %p139, %p140
      %p142 = scmp.ne.s32.totalorder %s131, %s132
      %p143 = scmp.eq.s32.totalorder %s29, 0
      %p144 = por %p142, %p143
      %p145 = scmp.ne.s32.totalorder %s131, %s132
      %p146 = scmp.eq.s32.totalorder %s30, 1
      %p147 = por %p145, %p146
      %p149 = scmp.ne.s32.totalorder %s132, %s148
      %p150 = scmp.eq.s32.totalorder %s30, 0
      %p151 = por %p149, %p150
      %s152 = ssub.s32 %s24, %s31
      %p153 = scmp.eq.s32.totalorder %s152, 0
      %s155 = sadd.s32 %s154, 1
      %s156 = scalar_select %p153, %s154, %s155
      %p159 = pneg %p153
      %p160 = scmp.eq.s32.totalorder %s24, 1
      %p161 = por %p159, %p160
      %p162 = scmp.ne.s32.totalorder %s154, %s157
      %p163 = scmp.eq.s32.totalorder %s24, 0
      %p164 = por %p162, %p163
      %p165 = scmp.ne.s32.totalorder %s154, %s157
      %p166 = scmp.eq.s32.totalorder %s29, 1
      %p167 = por %p165, %p166
      %p168 = scmp.ne.s32.totalorder %s157, %s158
      %p169 = scmp.eq.s32.totalorder %s29, 0
      %p170 = por %p168, %p169
      %p171 = scmp.ne.s32.totalorder %s157, %s158
      %p172 = scmp.eq.s32.totalorder %s30, 1
      %p173 = por %p171, %p172
      %p175 = scmp.ne.s32.totalorder %s158, %s174
      %p176 = scmp.eq.s32.totalorder %s30, 0
      %p177 = por %p175, %p176
      %p178 = scmp.le.s32.totalorder 1, %s24
      %p179 = scmp.lt.s32.totalorder %s24, 3
      %p180 = pnand %p178, %p179
      %p181 = pneg %p180
      // Predicated region
      $region9: #{tpu_custom_call.1} parent=5 // pred_check
        _
      $region10: #{tpu_custom_call.1} parent=5 // pred_check_branch
        %183 = sbr.rel (%p180) target = $region12
      $region11: #{tpu_custom_call.1} parent=5 // pred_region
        %s184 = ssub.s32 %s24, 1
        // Predicated region
        $region13: #{tpu_custom_call.1} parent=11 // pred_check
          %p185 = pneg %p97
        $region14: #{tpu_custom_call.1} parent=11 // pred_check_branch
          %187 = sbr.rel (%p185) target = $region16
        $region15: #{tpu_custom_call.1} parent=11 // pred_region
          _
        $region16: #{tpu_custom_call.1} parent=11 // pred_fallthru
          _
        // Predicated region
        $region17: #{tpu_custom_call.1} parent=11 // pred_check
          %p188 = pneg %p118
        $region18: #{tpu_custom_call.1} parent=11 // pred_check_branch
          %190 = sbr.rel (%p188) target = $region20
        $region19: #{tpu_custom_call.1} parent=11 // pred_region
          _
        $region20: #{tpu_custom_call.1} parent=11 // pred_fallthru
          _
      $region12: #{tpu_custom_call.1} parent=5 // pred_fallthru
        _
      %p191 = scmp.lt.s32.totalorder %s24, 2
      // Predicated region
      $region21: #{tpu_custom_call.1} parent=5 // pred_check
        %p192 = pneg %p191
      $region22: #{tpu_custom_call.1} parent=5 // pred_check_branch
        %194 = sbr.rel (%p192) target = $region24
      $region23: #{tpu_custom_call.1} parent=5 // pred_region
        // Predicated region
        $region25: #{tpu_custom_call.1} parent=23 // pred_check
          %p195 = pneg %p44
        $region26: #{tpu_custom_call.1} parent=23 // pred_check_branch
          %197 = sbr.rel (%p195) target = $region28
        $region27: #{tpu_custom_call.1} parent=23 // pred_region
          %s198 = sand.u32 %s34, 1
          %s199 = scalar_lea.sflag [#allocation3], %s198
          %s200 = sand.u32 %s34, 1
          %s201 = smul.addr %s200, 128
          %s202 = scalar_lea.vmem [#allocation2], %s201
          %204 = vsyncadd %s199, 0
          %s205 = smul.addr %s24, 16
          %s206 = smul.addr %s205, 8
          %s207 = scalar_lea.hbm %s0, %s206
          %s208 = sshll.u32 %s207, 4
          %s209 = int_to_ptr.hbm [resolvable:$true] %s208
          %s210 = sshll.u32 %s202, 4
          %s211 = int_to_ptr.vmem [resolvable:$true] %s210
          %216 = dma.hbm_to_vmem [thread:$0]  %s209, 2048, %s211, %s199, 256, 256, 16
        $region28: #{tpu_custom_call.1} parent=23 // pred_fallthru
          _
        // Predicated region
        $region29: #{tpu_custom_call.1} parent=23 // pred_check
          %p217 = pneg %p70
        $region30: #{tpu_custom_call.1} parent=23 // pred_check_branch
          %219 = sbr.rel (%p217) target = $region32
        $region31: #{tpu_custom_call.1} parent=23 // pred_region
          %s220 = sand.u32 %s60, 1
          %s221 = scalar_lea.sflag [#allocation6], %s220
          %s222 = sand.u32 %s60, 1
          %s223 = smul.addr %s222, 128
          %s224 = scalar_lea.vmem [#allocation5], %s223
          %226 = vsyncadd %s221, 0
          %s227 = smul.addr %s24, 16
          %s228 = smul.addr %s227, 8
          %s229 = scalar_lea.hbm %s1, %s228
          %s230 = sshll.u32 %s229, 4
          %s231 = int_to_ptr.hbm [resolvable:$true] %s230
          %s232 = sshll.u32 %s224, 4
          %s233 = int_to_ptr.vmem [resolvable:$true] %s232
          %238 = dma.hbm_to_vmem [thread:$0]  %s231, 2048, %s233, %s221, 256, 256, 16
        $region32: #{tpu_custom_call.1} parent=23 // pred_fallthru
          _
      $region24: #{tpu_custom_call.1} parent=5 // pred_fallthru
        _
      %p239 = scmp.le.s32.totalorder 1, %s24
      %p240 = scmp.lt.s32.totalorder %s24, 3
      %p241 = pnand %p239, %p240
      %p242 = pneg %p241
      // Predicated region
      $region33: #{tpu_custom_call.1} parent=5 // pred_check
        _
      $region34: #{tpu_custom_call.1} parent=5 // pred_check_branch
        %244 = sbr.rel (%p241) target = $region36
      $region35: #{tpu_custom_call.1} parent=5 // pred_region
        %s245 = ssub.s32 %s24, 1
        %s246 = sand.u32 %s37, 1
        %s247 = scalar_lea.sflag [#allocation3], %s246
        %s248 = sand.u32 %s37, 1
        %s249 = smul.addr %s248, 128
        %s250 = scalar_lea.vmem [#allocation2], %s249
        // Predicated region
        $region37: #{tpu_custom_call.1} parent=35 // pred_check
          %p251 = pneg %p50
        $region38: #{tpu_custom_call.1} parent=35 // pred_check_branch
          %253 = sbr.rel (%p251) target = $region40
        $region39: #{tpu_custom_call.1} parent=35 // pred_region
          %255 = dma.done %s247, 2048
        $region40: #{tpu_custom_call.1} parent=35 // pred_fallthru
          _
        %s256 = sand.u32 %s63, 1
        %s257 = scalar_lea.sflag [#allocation6], %s256
        %s258 = sand.u32 %s63, 1
        %s259 = smul.addr %s258, 128
        %s260 = scalar_lea.vmem [#allocation5], %s259
        // Predicated region
        $region41: #{tpu_custom_call.1} parent=35 // pred_check
          %p261 = pneg %p76
        $region42: #{tpu_custom_call.1} parent=35 // pred_check_branch
          %263 = sbr.rel (%p261) target = $region44
        $region43: #{tpu_custom_call.1} parent=35 // pred_region
          %265 = dma.done %s257, 2048
        $region44: #{tpu_custom_call.1} parent=35 // pred_fallthru
          _
        %s266 = sand.u32 %s37, 1
        %s267 = scalar_lea.sflag [#allocation3], %s266
        %s268 = sand.u32 %s37, 1
        %s269 = smul.addr %s268, 128
        %s270 = scalar_lea.vmem [#allocation2], %s269
        %p271 = pneg %p50
        %p272 = pneg %p47
        %s273 = sand.u32 %s63, 1
        %s274 = scalar_lea.sflag [#allocation6], %s273
        %s275 = sand.u32 %s63, 1
        %s276 = smul.addr %s275, 128
        %s277 = scalar_lea.vmem [#allocation5], %s276
        %p278 = pneg %p76
        %p279 = pneg %p73
        %p280 = pneg %p97
        %p281 = pneg %p94
        %p282 = pneg %p118
        %p283 = pneg %p115
        %p284 = pneg %p144
        %p285 = pneg %p141
        %s286 = sand.u32 %s131, 1
        %s287 = scalar_lea.sflag [#allocation4], %s286
        %s288 = sand.u32 %s131, 1
        %s289 = smul.addr %s288, 128
        %s290 = scalar_lea.vmem [#allocation7], %s289
        %p291 = pneg %p170
        %p292 = pneg %p167
        %s293 = sand.u32 %s157, 1
        %s294 = scalar_lea.sflag [#allocation9], %s293
        %s295 = sand.u32 %s157, 1
        %s296 = smul.addr %s295, 128
        %s297 = scalar_lea.vmem [#allocation8], %s296
        %v298 = vld [vmem:[%s250] sm:$0xff]
        %v299 = vld [vmem:[%s250 + $0x8] sm:$0xff]
        %v300 = vld [vmem:[%s250 + $0x10] sm:$0xff]
        %v301 = vld [vmem:[%s250 + $0x18] sm:$0xff]
        %v302 = vld [vmem:[%s250 + $0x20] sm:$0xff]
        %v303 = vld [vmem:[%s250 + $0x28] sm:$0xff]
        %v304 = vld [vmem:[%s250 + $0x30] sm:$0xff]
        %v305 = vld [vmem:[%s250 + $0x38] sm:$0xff]
        %v306 = vld [vmem:[%s250 + $0x40] sm:$0xff]
        %v307 = vld [vmem:[%s250 + $0x48] sm:$0xff]
        %v308 = vld [vmem:[%s250 + $0x50] sm:$0xff]
        %v309 = vld [vmem:[%s250 + $0x58] sm:$0xff]
        %v310 = vld [vmem:[%s250 + $0x60] sm:$0xff]
        %v311 = vld [vmem:[%s250 + $0x68] sm:$0xff]
        %v312 = vld [vmem:[%s250 + $0x70] sm:$0xff]
        %v313 = vld [vmem:[%s250 + $0x78] sm:$0xff]
        %v314 = vadd.f32 %v298, %v299
        %315 = vadd.xlane.f32.xlu0 %v314
        %v316 = vpop.xlane.xlu0 %315
        %v317 = vadd.f32 %v300, %v301
        %318 = vadd.xlane.f32.xlu0 %v317
        %v319 = vpop.xlane.xlu0 %318
        %v320 = vadd.f32 %v302, %v303
        %321 = vadd.xlane.f32.xlu0 %v320
        %v322 = vpop.xlane.xlu0 %321
        %v323 = vadd.f32 %v304, %v305
        %324 = vadd.xlane.f32.xlu0 %v323
        %v325 = vpop.xlane.xlu0 %324
        %v326 = vadd.f32 %v306, %v307
        %327 = vadd.xlane.f32.xlu0 %v326
        %v328 = vpop.xlane.xlu0 %327
        %v329 = vadd.f32 %v308, %v309
        %330 = vadd.xlane.f32.xlu0 %v329
        %v331 = vpop.xlane.xlu0 %330
        %v332 = vadd.f32 %v310, %v311
        %333 = vadd.xlane.f32.xlu0 %v332
        %v334 = vpop.xlane.xlu0 %333
        %v335 = vadd.f32 %v312, %v313
        %336 = vadd.xlane.f32.xlu0 %v335
        %v337 = vpop.xlane.xlu0 %336
        %v338 = vmul.f32 %v316, 0.00390625
        %v339 = vmul.f32 %v319, 0.00390625
        %v340 = vmul.f32 %v322, 0.00390625
        %v341 = vmul.f32 %v325, 0.00390625
        %v342 = vmul.f32 %v328, 0.00390625
        %v343 = vmul.f32 %v331, 0.00390625
        %v344 = vmul.f32 %v334, 0.00390625
        %v345 = vmul.f32 %v337, 0.00390625
        %v346 = vld [vmem:[%s260] sm:$0xff]
        %v347 = vld [vmem:[%s260 + $0x8] sm:$0xff]
        %v348 = vld [vmem:[%s260 + $0x10] sm:$0xff]
        %v349 = vld [vmem:[%s260 + $0x18] sm:$0xff]
        %v350 = vld [vmem:[%s260 + $0x20] sm:$0xff]
        %v351 = vld [vmem:[%s260 + $0x28] sm:$0xff]
        %v352 = vld [vmem:[%s260 + $0x30] sm:$0xff]
        %v353 = vld [vmem:[%s260 + $0x38] sm:$0xff]
        %v354 = vld [vmem:[%s260 + $0x40] sm:$0xff]
        %v355 = vld [vmem:[%s260 + $0x48] sm:$0xff]
        %v356 = vld [vmem:[%s260 + $0x50] sm:$0xff]
        %v357 = vld [vmem:[%s260 + $0x58] sm:$0xff]
        %v358 = vld [vmem:[%s260 + $0x60] sm:$0xff]
        %v359 = vld [vmem:[%s260 + $0x68] sm:$0xff]
        %v360 = vld [vmem:[%s260 + $0x70] sm:$0xff]
        %v361 = vld [vmem:[%s260 + $0x78] sm:$0xff]
        %v362 = vadd.f32 %v346, %v347
        %363 = vadd.xlane.f32.xlu0 %v362
        %v364 = vpop.xlane.xlu0 %363
        %v365 = vadd.f32 %v348, %v349
        %366 = vadd.xlane.f32.xlu0 %v365
        %v367 = vpop.xlane.xlu0 %366
        %v368 = vadd.f32 %v350, %v351
        %369 = vadd.xlane.f32.xlu0 %v368
        %v370 = vpop.xlane.xlu0 %369
        %v371 = vadd.f32 %v352, %v353
        %372 = vadd.xlane.f32.xlu0 %v371
        %v373 = vpop.xlane.xlu0 %372
        %v374 = vadd.f32 %v354, %v355
        %375 = vadd.xlane.f32.xlu0 %v374
        %v376 = vpop.xlane.xlu0 %375
        %v377 = vadd.f32 %v356, %v357
        %378 = vadd.xlane.f32.xlu0 %v377
        %v379 = vpop.xlane.xlu0 %378
        %v380 = vadd.f32 %v358, %v359
        %381 = vadd.xlane.f32.xlu0 %v380
        %v382 = vpop.xlane.xlu0 %381
        %v383 = vadd.f32 %v360, %v361
        %384 = vadd.xlane.f32.xlu0 %v383
        %v385 = vpop.xlane.xlu0 %384
        %v386 = vmul.f32 %v364, 0.00390625
        %v387 = vmul.f32 %v367, 0.00390625
        %v388 = vmul.f32 %v370, 0.00390625
        %v389 = vmul.f32 %v373, 0.00390625
        %v390 = vmul.f32 %v376, 0.00390625
        %v391 = vmul.f32 %v379, 0.00390625
        %v392 = vmul.f32 %v382, 0.00390625
        %v393 = vmul.f32 %v385, 0.00390625
        %v402 = vlaneseq
        %v403 = vand.u32 %v402, 127
        %v404 = vperm.slane %v338, %v403
        %v405 = vadd.s32 %v403, 4294967288
        %v406 = vperm.slane %v339, %v405
        %vm407 = vcmask 130112
        %v408 = vsel %vm407, %v406, %v404
        %v409 = vadd.s32 %v403, 4294967280
        %v410 = vperm.slane %v340, %v409
        %vm411 = vcmask 195712
        %v412 = vsel %vm411, %v410, %v408
        %v413 = vadd.s32 %v403, 4294967272
        %v414 = vperm.slane %v341, %v413
        %vm415 = vcmask 261312
        %v416 = vsel %vm415, %v414, %v412
        %v417 = vadd.s32 %v403, 4294967264
        %v418 = vperm.slane %v342, %v417
        %vm419 = vcmask 326912
        %v420 = vsel %vm419, %v418, %v416
        %v421 = vadd.s32 %v403, 4294967256
        %v422 = vperm.slane %v343, %v421
        %vm423 = vcmask 392512
        %v424 = vsel %vm423, %v422, %v420
        %v425 = vadd.s32 %v403, 4294967248
        %v426 = vperm.slane %v344, %v425
        %vm427 = vcmask 458112
        %v428 = vsel %vm427, %v426, %v424
        %v429 = vadd.s32 %v403, 4294967240
        %v430 = vperm.slane %v345, %v429
        %vm431 = vcmask 523712
        %v432 = vsel %vm431, %v430, %v428
        %v442 = vadd.s32 %v403, 4294967232
        %v443 = vperm.slane %v386, %v442
        %v444 = vadd.s32 %v403, 4294967224
        %v445 = vperm.slane %v387, %v444
        %vm446 = vcmask 654912
        %v447 = vsel %vm446, %v445, %v443
        %v448 = vadd.s32 %v403, 4294967216
        %v449 = vperm.slane %v388, %v448
        %vm450 = vcmask 720512
        %v451 = vsel %vm450, %v449, %v447
        %v452 = vadd.s32 %v403, 4294967208
        %v453 = vperm.slane %v389, %v452
        %vm454 = vcmask 786112
        %v455 = vsel %vm454, %v453, %v451
        %v456 = vadd.s32 %v403, 4294967200
        %v457 = vperm.slane %v390, %v456
        %vm458 = vcmask 851712
        %v459 = vsel %vm458, %v457, %v455
        %v460 = vadd.s32 %v403, 4294967192
        %v461 = vperm.slane %v391, %v460
        %vm462 = vcmask 917312
        %v463 = vsel %vm462, %v461, %v459
        %v464 = vadd.s32 %v403, 4294967184
        %v465 = vperm.slane %v392, %v464
        %vm466 = vcmask 982912
        %v467 = vsel %vm466, %v465, %v463
        %v468 = vadd.s32 %v403, 4294967176
        %v469 = vperm.slane %v393, %v468
        %vm470 = vcmask 1048512
        %v471 = vsel %vm470, %v469, %v467
        %vm473 = vcmask 523264
        %v474 = vsel %vm473, %v432, %v471
        %v475 = vld [vmem:[%s2] sm:$0xff]
        %v476 = vld [vmem:[%s2 + $0x8] sm:$0xff]
        %v477 = vld [vmem:[%s2 + $0x10] sm:$0xff]
        %v478 = vld [vmem:[%s2 + $0x18] sm:$0xff]
        %v479 = vld [vmem:[%s2 + $0x20] sm:$0xff]
        %v480 = vld [vmem:[%s2 + $0x28] sm:$0xff]
        %v481 = vld [vmem:[%s2 + $0x30] sm:$0xff]
        %v482 = vld [vmem:[%s2 + $0x38] sm:$0xff]
        %v483 = vld [vmem:[%s2 + $0x40] sm:$0xff]
        %v484 = vld [vmem:[%s2 + $0x48] sm:$0xff]
        %v485 = vld [vmem:[%s2 + $0x50] sm:$0xff]
        %v486 = vld [vmem:[%s2 + $0x58] sm:$0xff]
        %v487 = vld [vmem:[%s2 + $0x60] sm:$0xff]
        %v488 = vld [vmem:[%s2 + $0x68] sm:$0xff]
        %v489 = vld [vmem:[%s2 + $0x70] sm:$0xff]
        %v490 = vld [vmem:[%s2 + $0x78] sm:$0xff]
        %491 = vmatpush.msra.mxu0 %v490
        %492 = vmatpush.msra.mxu0 %v489
        %493 = vmatpush.msra.mxu0 %v488
        %494 = vmatpush.msra.mxu0 %v487
        %495 = vmatpush.msra.mxu0 %v486
        %496 = vmatpush.msra.mxu0 %v485
        %497 = vmatpush.msra.mxu0 %v484
        %498 = vmatpush.msra.mxu0 %v483
        %499 = vmatpush.msra.mxu0 %v482
        %500 = vmatpush.msra.mxu0 %v481
        %501 = vmatpush.msra.mxu0 %v480
        %502 = vmatpush.msra.mxu0 %v479
        %503 = vmatpush.msra.mxu0 %v478
        %504 = vmatpush.msra.mxu0 %v477
        %505 = vmatpush.msra.mxu0 %v476
        %506 = vmatpush.msra.mxu0 %v475
        %507 = vmatmul.f32.gmra.mxu0 %v474
        %v508 = vpop.f32.mrf.mxu0
        %v509 = vadd.f32 0.0, %v508
        %510 = vdwg.mxu0
        %v511 = vmax.f32 %v509, 0.0
        %v512 = vld [vmem:[%s3] sm:$0xff]
        %v513 = vld [vmem:[%s3 + $0x8] sm:$0xff]
        %vm514 = vcmask 130048
        %v516 = vsel %vm514, %v511, 0
        %518 = vmatpush.msra.mxu0 0.0
        %519 = vmatpush.msra.mxu0 0.0
        %520 = vmatpush.msra.mxu0 0.0
        %521 = vmatpush.msra.mxu0 0.0
        %522 = vmatpush.msra.mxu0 0.0
        %523 = vmatpush.msra.mxu0 0.0
        %524 = vmatpush.msra.mxu0 0.0
        %525 = vmatpush.msra.mxu0 0.0
        %526 = vmatpush.msra.mxu0 0.0
        %527 = vmatpush.msra.mxu0 0.0
        %528 = vmatpush.msra.mxu0 0.0
        %529 = vmatpush.msra.mxu0 0.0
        %530 = vmatpush.msra.mxu0 0.0
        %531 = vmatpush.msra.mxu0 0.0
        %532 = vmatpush.msra.mxu0 %v513
        %533 = vmatpush.msra.mxu0 %v512
        %534 = vmatmul.f32.gmra.mxu0 %v516
        %v535 = vpop.f32.mrf.mxu0
        %v536 = vadd.f32 0.0, %v535
        %537 = vdwg.mxu0
        %539 = vrot.lane.b32.xlu0 %v536, 64
        %v540 = vpop.permute.xlu0 %539
        %v542 = vmax.f32 %v536, %v540
        %v543 = vsub.f32 %v536, %v542
        %v544 = vmul.f32 %v543, 1.442695
        %v545 = vpow.pop %v544
        %547 = vrot.lane.b32.xlu0 %v542, 64
        %v548 = vpop.permute.xlu0 %547
        %v550 = vsub.f32 %v536, %v548
        %v551 = vmul.f32 %v550, 1.442695
        %v552 = vpow.pop %v551
        %554 = vrot.lane.b32.xlu0 %v552, 64
        %v555 = vpop.permute.xlu0 %554
        %v557 = vadd.f32 %v545, %v555
        %v558 = vrcp.pop %v557
        %v559 = vmul.f32 %v557, %v558
        %v560 = vsub.f32 1.0, %v559
        %v561 = vmul.f32 %v558, %v560
        %v562 = vadd.f32 %v558, %v561
        %vm563 = vweird.f32 %v557
        %vm564 = vweird.f32 %v558
        %vm565 = vmor %vm563, %vm564
        %v566 = vsel %vm565, %v558, %v562
        %v567 = vand.u32 2147483647, %v557
        %vm568 = vcmp.eq.f32.partialorder %v567, 8.507059e+37
        %v569 = vand.u32 %v557, 2147483648
        %v570 = vor.u32 1.1754944e-38, %v569
        %v571 = vsel %vm568, %v570, %v566
        %v572 = vmul.f32 1.0, %v571
        %v573 = vmul.f32 %v545, %v572
        %575 = vrot.lane.b32.xlu0 %v572, 64
        %v576 = vpop.permute.xlu0 %575
        %v578 = vmul.f32 %v552, %v576
        %v579 = vperm.slane %v573, 0
        %v580 = vlaneseq
        %v581 = vshrl.u32 %v580, 7
        %583 = vset.pattern.permute.xlu0 %v581
        %584 = vperm.xlu0 %583, %v579
        %v585 = vpop.permute.xlu0 %584
        %v586 = vlaneseq
        %v587 = vshrl.u32 %v586, 7
        %v588 = vadd.s32 %v587, 8
        %589 = vset.pattern.permute.xlu0 %v588
        %590 = vperm.xlu0 %589, %v579
        %v591 = vpop.permute.xlu0 %590
        %v592 = vlaneseq
        %v593 = vshrl.u32 %v592, 7
        %v594 = vadd.s32 %v593, 16
        %595 = vset.pattern.permute.xlu0 %v594
        %596 = vperm.xlu0 %595, %v579
        %v597 = vpop.permute.xlu0 %596
        %v598 = vlaneseq
        %v599 = vshrl.u32 %v598, 7
        %v600 = vadd.s32 %v599, 24
        %601 = vset.pattern.permute.xlu0 %v600
        %602 = vperm.xlu0 %601, %v579
        %v603 = vpop.permute.xlu0 %602
        %v604 = vlaneseq
        %v605 = vshrl.u32 %v604, 7
        %v606 = vadd.s32 %v605, 32
        %607 = vset.pattern.permute.xlu0 %v606
        %608 = vperm.xlu0 %607, %v579
        %v609 = vpop.permute.xlu0 %608
        %v610 = vlaneseq
        %v611 = vshrl.u32 %v610, 7
        %v612 = vadd.s32 %v611, 40
        %613 = vset.pattern.permute.xlu0 %v612
        %614 = vperm.xlu0 %613, %v579
        %v615 = vpop.permute.xlu0 %614
        %v616 = vlaneseq
        %v617 = vshrl.u32 %v616, 7
        %v618 = vadd.s32 %v617, 48
        %619 = vset.pattern.permute.xlu0 %v618
        %620 = vperm.xlu0 %619, %v579
        %v621 = vpop.permute.xlu0 %620
        %v622 = vlaneseq
        %v623 = vshrl.u32 %v622, 7
        %v624 = vadd.s32 %v623, 56
        %625 = vset.pattern.permute.xlu0 %v624
        %626 = vperm.xlu0 %625, %v579
        %v627 = vpop.permute.xlu0 %626
        %v628 = vmul.f32 %v298, %v585
        %v629 = vmul.f32 %v299, %v585
        %v630 = vmul.f32 %v300, %v591
        %v631 = vmul.f32 %v301, %v591
        %v632 = vmul.f32 %v302, %v597
        %v633 = vmul.f32 %v303, %v597
        %v634 = vmul.f32 %v304, %v603
        %v635 = vmul.f32 %v305, %v603
        %v636 = vmul.f32 %v306, %v609
        %v637 = vmul.f32 %v307, %v609
        %v638 = vmul.f32 %v308, %v615
        %v639 = vmul.f32 %v309, %v615
        %v640 = vmul.f32 %v310, %v621
        %v641 = vmul.f32 %v311, %v621
        %v642 = vmul.f32 %v312, %v627
        %v643 = vmul.f32 %v313, %v627
        %644 = vst [vmem:[%s290] sm:$0xff] %v628
        %645 = vst [vmem:[%s290 + $0x8] sm:$0xff] %v629
        %646 = vst [vmem:[%s290 + $0x10] sm:$0xff] %v630
        %647 = vst [vmem:[%s290 + $0x18] sm:$0xff] %v631
        %648 = vst [vmem:[%s290 + $0x20] sm:$0xff] %v632
        %649 = vst [vmem:[%s290 + $0x28] sm:$0xff] %v633
        %650 = vst [vmem:[%s290 + $0x30] sm:$0xff] %v634
        %651 = vst [vmem:[%s290 + $0x38] sm:$0xff] %v635
        %652 = vst [vmem:[%s290 + $0x40] sm:$0xff] %v636
        %653 = vst [vmem:[%s290 + $0x48] sm:$0xff] %v637
        %654 = vst [vmem:[%s290 + $0x50] sm:$0xff] %v638
        %655 = vst [vmem:[%s290 + $0x58] sm:$0xff] %v639
        %656 = vst [vmem:[%s290 + $0x60] sm:$0xff] %v640
        %657 = vst [vmem:[%s290 + $0x68] sm:$0xff] %v641
        %658 = vst [vmem:[%s290 + $0x70] sm:$0xff] %v642
        %659 = vst [vmem:[%s290 + $0x78] sm:$0xff] %v643
        %v660 = vld [vmem:[%s260] sm:$0xff]
        %v661 = vld [vmem:[%s260 + $0x8] sm:$0xff]
        %v662 = vld [vmem:[%s260 + $0x10] sm:$0xff]
        %v663 = vld [vmem:[%s260 + $0x18] sm:$0xff]
        %v664 = vld [vmem:[%s260 + $0x20] sm:$0xff]
        %v665 = vld [vmem:[%s260 + $0x28] sm:$0xff]
        %v666 = vld [vmem:[%s260 + $0x30] sm:$0xff]
        %v667 = vld [vmem:[%s260 + $0x38] sm:$0xff]
        %v668 = vld [vmem:[%s260 + $0x40] sm:$0xff]
        %v669 = vld [vmem:[%s260 + $0x48] sm:$0xff]
        %v670 = vld [vmem:[%s260 + $0x50] sm:$0xff]
        %v671 = vld [vmem:[%s260 + $0x58] sm:$0xff]
        %v672 = vld [vmem:[%s260 + $0x60] sm:$0xff]
        %v673 = vld [vmem:[%s260 + $0x68] sm:$0xff]
        %v674 = vld [vmem:[%s260 + $0x70] sm:$0xff]
        %v675 = vld [vmem:[%s260 + $0x78] sm:$0xff]
        %v676 = vperm.slane %v578, 0
        %v677 = vlaneseq
        %v678 = vshrl.u32 %v677, 7
        %v679 = vadd.s32 %v678, 64
        %680 = vset.pattern.permute.xlu0 %v679
        %681 = vperm.xlu0 %680, %v676
        %v682 = vpop.permute.xlu0 %681
        %v683 = vlaneseq
        %v684 = vshrl.u32 %v683, 7
        %v685 = vadd.s32 %v684, 72
        %686 = vset.pattern.permute.xlu0 %v685
        %687 = vperm.xlu0 %686, %v676
        %v688 = vpop.permute.xlu0 %687
        %v689 = vlaneseq
        %v690 = vshrl.u32 %v689, 7
        %v691 = vadd.s32 %v690, 80
        %692 = vset.pattern.permute.xlu0 %v691
        %693 = vperm.xlu0 %692, %v676
        %v694 = vpop.permute.xlu0 %693
        %v695 = vlaneseq
        %v696 = vshrl.u32 %v695, 7
        %v697 = vadd.s32 %v696, 88
        %698 = vset.pattern.permute.xlu0 %v697
        %699 = vperm.xlu0 %698, %v676
        %v700 = vpop.permute.xlu0 %699
        %v701 = vlaneseq
        %v702 = vshrl.u32 %v701, 7
        %v703 = vadd.s32 %v702, 96
        %704 = vset.pattern.permute.xlu0 %v703
        %705 = vperm.xlu0 %704, %v676
        %v706 = vpop.permute.xlu0 %705
        %v707 = vlaneseq
        %v708 = vshrl.u32 %v707, 7
        %v709 = vadd.s32 %v708, 104
        %710 = vset.pattern.permute.xlu0 %v709
        %711 = vperm.xlu0 %710, %v676
        %v712 = vpop.permute.xlu0 %711
        %v713 = vlaneseq
        %v714 = vshrl.u32 %v713, 7
        %v715 = vadd.s32 %v714, 112
        %716 = vset.pattern.permute.xlu0 %v715
        %717 = vperm.xlu0 %716, %v676
        %v718 = vpop.permute.xlu0 %717
        %v719 = vlaneseq
        %v720 = vshrl.u32 %v719, 7
        %v721 = vadd.s32 %v720, 120
        %722 = vset.pattern.permute.xlu0 %v721
        %723 = vperm.xlu0 %722, %v676
        %v724 = vpop.permute.xlu0 %723
        %v725 = vmul.f32 %v660, %v682
        %v726 = vmul.f32 %v661, %v682
        %v727 = vmul.f32 %v662, %v688
        %v728 = vmul.f32 %v663, %v688
        %v729 = vmul.f32 %v664, %v694
        %v730 = vmul.f32 %v665, %v694
        %v731 = vmul.f32 %v666, %v700
        %v732 = vmul.f32 %v667, %v700
        %v733 = vmul.f32 %v668, %v706
        %v734 = vmul.f32 %v669, %v706
        %v735 = vmul.f32 %v670, %v712
        %v736 = vmul.f32 %v671, %v712
        %v737 = vmul.f32 %v672, %v718
        %v738 = vmul.f32 %v673, %v718
        %v739 = vmul.f32 %v674, %v724
        %v740 = vmul.f32 %v675, %v724
        %741 = vst [vmem:[%s297] sm:$0xff] %v725
        %742 = vst [vmem:[%s297 + $0x8] sm:$0xff] %v726
        %743 = vst [vmem:[%s297 + $0x10] sm:$0xff] %v727
        %744 = vst [vmem:[%s297 + $0x18] sm:$0xff] %v728
        %745 = vst [vmem:[%s297 + $0x20] sm:$0xff] %v729
        %746 = vst [vmem:[%s297 + $0x28] sm:$0xff] %v730
        %747 = vst [vmem:[%s297 + $0x30] sm:$0xff] %v731
        %748 = vst [vmem:[%s297 + $0x38] sm:$0xff] %v732
        %749 = vst [vmem:[%s297 + $0x40] sm:$0xff] %v733
        %750 = vst [vmem:[%s297 + $0x48] sm:$0xff] %v734
        %751 = vst [vmem:[%s297 + $0x50] sm:$0xff] %v735
        %752 = vst [vmem:[%s297 + $0x58] sm:$0xff] %v736
        %753 = vst [vmem:[%s297 + $0x60] sm:$0xff] %v737
        %754 = vst [vmem:[%s297 + $0x68] sm:$0xff] %v738
        %755 = vst [vmem:[%s297 + $0x70] sm:$0xff] %v739
        %756 = vst [vmem:[%s297 + $0x78] sm:$0xff] %v740
        %s757 = sand.u32 %s131, 1
        %s758 = scalar_lea.sflag [#allocation4], %s757
        %s759 = sand.u32 %s131, 1
        %s760 = smul.addr %s759, 128
        %s761 = scalar_lea.vmem [#allocation7], %s760
        %s762 = sand.u32 %s157, 1
        %s763 = scalar_lea.sflag [#allocation9], %s762
        %s764 = sand.u32 %s157, 1
        %s765 = smul.addr %s764, 128
        %s766 = scalar_lea.vmem [#allocation8], %s765
        // Predicated region
        $region45: #{tpu_custom_call.1} parent=35 // pred_check
          %p767 = pneg %p141
        $region46: #{tpu_custom_call.1} parent=35 // pred_check_branch
          %769 = sbr.rel (%p767) target = $region48
        $region47: #{tpu_custom_call.1} parent=35 // pred_region
          %771 = vsyncadd %s758, 0
          %s772 = smul.addr %s29, 16
          %s773 = smul.addr %s772, 8
          %s774 = scalar_lea.hbm %s4, %s773
          %s775 = sshll.u32 %s761, 4
          %s776 = int_to_ptr.vmem [resolvable:$true] %s775
          %s777 = sshll.u32 %s774, 4
          %s778 = int_to_ptr.hbm [resolvable:$true] %s777
          %783 = dma.vmem_to_hbm [thread:$0]  %s776, 2048, %s778, %s758, 256, 256, 16
        $region48: #{tpu_custom_call.1} parent=35 // pred_fallthru
          _
        // Predicated region
        $region49: #{tpu_custom_call.1} parent=35 // pred_check
          %p784 = pneg %p167
        $region50: #{tpu_custom_call.1} parent=35 // pred_check_branch
          %786 = sbr.rel (%p784) target = $region52
        $region51: #{tpu_custom_call.1} parent=35 // pred_region
          %788 = vsyncadd %s763, 0
          %s789 = smul.addr %s29, 16
          %s790 = smul.addr %s789, 8
          %s791 = scalar_lea.hbm %s5, %s790
          %s792 = sshll.u32 %s766, 4
          %s793 = int_to_ptr.vmem [resolvable:$true] %s792
          %s794 = sshll.u32 %s791, 4
          %s795 = int_to_ptr.hbm [resolvable:$true] %s794
          %800 = dma.vmem_to_hbm [thread:$0]  %s793, 2048, %s795, %s763, 256, 256, 16
        $region52: #{tpu_custom_call.1} parent=35 // pred_fallthru
          _
      $region36: #{tpu_custom_call.1} parent=5 // pred_fallthru
        _
      %p801 = scmp.le.s32.totalorder 2, %s24
      // Predicated region
      $region53: #{tpu_custom_call.1} parent=5 // pred_check
        %p802 = pneg %p801
      $region54: #{tpu_custom_call.1} parent=5 // pred_check_branch
        %804 = sbr.rel (%p802) target = $region56
      $region55: #{tpu_custom_call.1} parent=5 // pred_region
        %s805 = ssub.s32 %s24, 2
        // Predicated region
        $region57: #{tpu_custom_call.1} parent=55 // pred_check
          %p806 = pneg %p147
        $region58: #{tpu_custom_call.1} parent=55 // pred_check_branch
          %808 = sbr.rel (%p806) target = $region60
        $region59: #{tpu_custom_call.1} parent=55 // pred_region
          %s809 = sand.u32 %s132, 1
          %s810 = scalar_lea.sflag [#allocation4], %s809
          %s811 = sand.u32 %s132, 1
          %s812 = smul.addr %s811, 128
          %s813 = scalar_lea.vmem [#allocation7], %s812
          %815 = dma.done %s810, 2048
        $region60: #{tpu_custom_call.1} parent=55 // pred_fallthru
          _
        // Predicated region
        $region61: #{tpu_custom_call.1} parent=55 // pred_check
          %p816 = pneg %p173
        $region62: #{tpu_custom_call.1} parent=55 // pred_check_branch
          %818 = sbr.rel (%p816) target = $region64
        $region63: #{tpu_custom_call.1} parent=55 // pred_region
          %s819 = sand.u32 %s158, 1
          %s820 = scalar_lea.sflag [#allocation9], %s819
          %s821 = sand.u32 %s158, 1
          %s822 = smul.addr %s821, 128
          %s823 = scalar_lea.vmem [#allocation8], %s822
          %825 = dma.done %s820, 2048
        $region64: #{tpu_custom_call.1} parent=55 // pred_fallthru
          _
      $region56: #{tpu_custom_call.1} parent=5 // pred_fallthru
        _
    $region6: #{tpu_custom_call.1} parent=1 // loop_footer
      %s28 = sadd.s32 1, %s24
    $region7: #{tpu_custom_call.1} parent=1 // loop_footer_branch
      %23 = sbr.rel target = $region3
    $region8: #{tpu_custom_call.1} parent=1 // loop_exit
      _
    %826 = vsyncpa [#allocation3], 1
    %s827 = scalar_lea.sflag [#allocation3], 1
    %828 = vsyncpa %s827, 1
    %829 = vsyncpa [#allocation6], 1
    %s830 = scalar_lea.sflag [#allocation6], 1
    %831 = vsyncpa %s830, 1
    %832 = vsyncpa [#allocation4], 1
    %s833 = scalar_lea.sflag [#allocation4], 1
    %834 = vsyncpa %s833, 1
    %835 = vsyncpa [#allocation9], 1
    %s836 = scalar_lea.sflag [#allocation9], 1
    %837 = vsyncpa %s836, 1

</llo_original>
